<compile_context>
chip_gen: v5e
topology: v5e:2x2
jax: 0.10.0
libtpu: 0.0.40
codegen_flags: <defaults>
</compile_context>

<pallas_src>
import jax
import jax.numpy as jnp
from jax.experimental import pallas as pl
from jax.experimental.pallas import tpu as pltpu

NEG_SLOPE = 0.01  # torch.nn.LeakyReLU default negative_slope


# ----------------------------------------------------------------------------
# Small helpers
# ----------------------------------------------------------------------------
def _round_up(x, m):
    return (x + m - 1) // m * m


def _cdiv(a, b):
    return (a + b - 1) // b


def _vmem_budget_bytes():
    """~85% of physical VMEM per core; safe fallback if the query is unavailable."""
    try:
        info = pltpu.get_tpu_info()
        for name in ("vmem_capacity_bytes", "vmem_size_bytes", "vmem_bytes"):
            cap = getattr(info, name, None)
            if cap:
                return int(cap * 0.85)
    except Exception:
        pass
    return 48 * 1024 * 1024  # compiles on v5e/v6e/v7x


def _plan_geometry(d_model, d_ff, *, row_tile, vmem_budget,
                   compute_itemsize, out_itemsize):
    """Pick lane-dense padded dims and the d_ff tiling so the per-step working
    set (double-buffered inputs/outputs + f32 acc + f32 h temp) fits VMEM."""
    d_model_p = _round_up(d_model, 128)
    d_ff_p0 = _round_up(d_ff, 128)
    limit = int(0.70 * vmem_budget)  # headroom for compiler-internal scratch

    # Per-step VMEM bytes, linear in the d_ff tile width tf.
    def per_tf(tm):   # w1 col + w2 row (x2 buffers, bf16) + f32 h temp + b1 (x2)
        return 4 * compute_itemsize * d_model_p + 4 * tm + 8

    def const(tm):    # x block (x2) + out block (x2) + f32 acc scratch + b2 (x2)
        return ((2 * compute_itemsize + 2 * out_itemsize + 4) * tm * d_model_p
                + 8 * d_model_p)

    tm_cap = row_tile
    while tm_cap > 16 and const(tm_cap) + per_tf(tm_cap) * 128 > limit:
        tm_cap //= 2

    if const(tm_cap) + per_tf(tm_cap) * d_ff_p0 <= limit:
        tf, n_ff = d_ff_p0, 1            # full weight residency: fetched once
    else:
        tf_fit = max(128, ((limit - const(tm_cap)) // per_tf(tm_cap)) // 128 * 128)
        n_ff = _cdiv(d_ff_p0, tf_fit)
        # Balance the tiles so the zero-column padding stays < 128.
        tf = _round_up(_cdiv(d_ff_p0, n_ff), 128)
    return dict(d_model_p=d_model_p, d_ff_p=tf * n_ff, tf=tf, n_ff=n_ff,
                row_tile=tm_cap)


def _row_tiling(M, row_tile):
    unit = 16  # sublane pack for bf16 blocks (also a multiple of 8 for f32)
    if M <= row_tile:
        tm = _round_up(max(M, 1), unit)
        return tm, tm
    n = _cdiv(M, row_tile)
    tm = _round_up(_cdiv(M, n), unit)
    return tm, tm * n


# ----------------------------------------------------------------------------
# Kernel
# ----------------------------------------------------------------------------
def _ffn_kernel(x_ref, w1_ref, b1_ref, w2_ref, b2_ref, o_ref, acc_ref):
    # Grid: (row tiles i [parallel], d_ff tiles j [arbitrary/reduction]).
    j = pl.program_id(1)

    @pl.when(j == 0)
    def _():
        acc_ref[...] = jnp.zeros_like(acc_ref)

    # Matmul #1 on the MXU (bf16 operands, f32 accumulate), bias + LeakyReLU in f32.
    h = jnp.dot(x_ref[...], w1_ref[...], preferred_element_type=jnp.float32)
    h = h + b1_ref[...]
    h = jnp.maximum(h, NEG_SLOPE * h)            # LeakyReLU: one vmul + one vmax

    # Matmul #2: accumulate this d_ff slab's contribution (bf16 operands, f32 acc).
    acc_ref[...] += jnp.dot(h.astype(w2_ref.dtype), w2_ref[...],
                            preferred_element_type=jnp.float32)

    @pl.when(j == pl.num_programs(1) - 1)
    def _():
        # Second bias added exactly once per row tile.
        o_ref[...] = (acc_ref[...] + b2_ref[...]).astype(o_ref.dtype)


def _ffn_call(xp, w1p, b1p, w2p, b2p, *, tm, tf, n_ff, d_model_p,
              out_dtype, vmem_limit, cost):
    M_p = xp.shape[0]
    grid = (M_p // tm, n_ff)
    return pl.pallas_call(
        _ffn_kernel,
        out_shape=jax.ShapeDtypeStruct((M_p, d_model_p), out_dtype),
        grid_spec=pltpu.PrefetchScalarGridSpec(
            num_scalar_prefetch=0,
            grid=grid,
            in_specs=[
                pl.BlockSpec((tm, d_model_p), lambda i, j: (i, 0)),   # x rows
                pl.BlockSpec((d_model_p, tf), lambda i, j: (0, j)),   # W1 slab
                pl.BlockSpec((1, tf), lambda i, j: (0, j)),           # b1 slab
                pl.BlockSpec((tf, d_model_p), lambda i, j: (j, 0)),   # W2 slab
                pl.BlockSpec((1, d_model_p), lambda i, j: (0, 0)),    # b2
            ],
            out_specs=pl.BlockSpec((tm, d_model_p), lambda i, j: (i, 0)),
            scratch_shapes=[pltpu.VMEM((tm, d_model_p), jnp.float32)],
        ),
        compiler_params=pltpu.CompilerParams(
            dimension_semantics=("parallel", "arbitrary"),
            vmem_limit_bytes=vmem_limit,
        ),
        cost_estimate=cost,
    )(xp, w1p, b1p, w2p, b2p)


# ----------------------------------------------------------------------------
# Wrapper: prepare weights once, return a jitted apply(x)
# ----------------------------------------------------------------------------
def make_feedforward(w1, b1, w2, b2, *, compute_dtype=jnp.bfloat16, row_tile=512):
    """w1:(d_model,d_ff), b1:(d_ff,), w2:(d_ff,d_model), b2:(d_model,).
    Returns apply(x) with x:(..., d_model) -> (..., d_model)."""
    d_model, d_ff = w1.shape
    assert w2.shape == (d_ff, d_model)

    budget = _vmem_budget_bytes()
    ci = jnp.dtype(compute_dtype).itemsize
    plan = _plan_geometry(d_model, d_ff, row_tile=row_tile, vmem_budget=budget,
                          compute_itemsize=ci, out_itemsize=4)
    dmp, dfp = plan["d_model_p"], plan["d_ff_p"]
    tf, n_ff, rt = plan["tf"], plan["n_ff"], plan["row_tile"]
    vmem_limit = int(budget)

    # Pad + cast weights ONCE (outside the per-call path); biases stay f32.
    w1p = jnp.pad(w1, ((0, dmp - d_model), (0, dfp - d_ff))).astype(compute_dtype)
    w2p = jnp.pad(w2, ((0, dfp - d_ff), (0, dmp - d_model))).astype(compute_dtype)
    b1p = jnp.pad(b1.astype(jnp.float32).reshape(1, d_ff),
                  ((0, 0), (0, dfp - d_ff)))
    b2p = jnp.pad(b2.astype(jnp.float32).reshape(1, d_model),
                  ((0, 0), (0, dmp - d_model)))

    def apply(x):
        assert x.shape[-1] == d_model
        orig_shape = x.shape
        out_dtype = x.dtype
        x2d = x.reshape(-1, d_model)
        M = x2d.shape[0]
        tm, M_p = _row_tiling(M, rt)
        xp = jnp.pad(x2d, ((0, M_p - M), (0, dmp - d_model))).astype(compute_dtype)

        cost = pl.CostEstimate(
            flops=4 * M_p * dmp * dfp,                 # two matmuls
            transcendentals=0,
            bytes_accessed=(xp.size * ci
                            + (w1p.size + w2p.size) * ci
                            + (b1p.size + b2p.size) * 4
                            + M_p * dmp * jnp.dtype(out_dtype).itemsize),
        )
        out = _ffn_call(xp, w1p, b1p, w2p, b2p,
                        tm=tm, tf=tf, n_ff=n_ff, d_model_p=dmp,
                        out_dtype=out_dtype, vmem_limit=vmem_limit, cost=cost)
        return out[:M, :d_model].reshape(orig_shape)

    return jax.jit(apply)


def feedforward(x, w1, b1, w2, b2, **kwargs):
    """One-shot convenience wrapper (prepares weights on every call)."""
    return make_feedforward(w1, b1, w2, b2, **kwargs)(x)


def init_params(key, d_model, d_ff):
    """Deterministic init mimicking nn.Linear's U(-1/sqrt(fan_in), 1/sqrt(fan_in))."""
    k1, k2, k3, k4 = jax.random.split(key, 4)
    bound1 = 1.0 / (d_model ** 0.5)
    bound2 = 1.0 / (d_ff ** 0.5)
    w1 = jax.random.uniform(k1, (d_model, d_ff), jnp.float32, -bound1, bound1)
    b1 = jax.random.uniform(k2, (d_ff,), jnp.float32, -bound1, bound1)
    w2 = jax.random.uniform(k3, (d_ff, d_model), jnp.float32, -bound2, bound2)
    b2 = jax.random.uniform(k4, (d_model,), jnp.float32, -bound2, bound2)
    return w1, b1, w2, b2


if __name__ == "__main__":
    batch, seq, d_model, d_ff = 2, 8, 32, 64
    key = jax.random.PRNGKey(0)
    kx, kp = jax.random.split(key)
    x = jax.random.normal(kx, (batch, seq, d_model), jnp.float32)
    w1, b1, w2, b2 = init_params(kp, d_model, d_ff)

    ffn = make_feedforward(w1, b1, w2, b2)
    out = jax.block_until_ready(ffn(x))

    # Reference check in plain f32 JAX (kernel matmuls run in bf16 -> loose tol).
    h_ref = x @ w1 + b1
    h_ref = jnp.maximum(h_ref, NEG_SLOPE * h_ref)
    ref = h_ref @ w2 + b2
    assert out.shape == (batch, seq, d_model)
    assert out.dtype == x.dtype
    assert jnp.allclose(out, ref, atol=3e-2, rtol=3e-2), \
        float(jnp.max(jnp.abs(out - ref)))

    print("KERNEL_OK")
</pallas_src>

<mosaic_0001>
module attributes {stable_mosaic.version = 11 : i64} {
  func.func @_ffn_kernel(%arg0: i32, %arg1: i32, %arg2: memref<16x128xbf16, #tpu.memory_space<vmem>>, %arg3: memref<128x128xbf16, #tpu.memory_space<vmem>>, %arg4: memref<1x128xf32, #tpu.memory_space<vmem>>, %arg5: memref<128x128xbf16, #tpu.memory_space<vmem>>, %arg6: memref<1x128xf32, #tpu.memory_space<vmem>>, %arg7: memref<16x128xf32, #tpu.memory_space<vmem>>, %arg8: memref<16x128xf32, #tpu.memory_space<vmem>>) attributes {dimension_semantics = [#tpu.dimension_semantics<parallel>, #tpu.dimension_semantics<arbitrary>], iteration_bounds = array<i64: 1, 1>, scalar_prefetch = 0 : i64, scratch_operands = 1 : i64, tpu.core_type = #tpu.core_type<tc>, window_params = [{transform_indices = @transform_0, window_bounds = array<i64: 16, 128>}, {transform_indices = @transform_1, window_bounds = array<i64: 128, 128>}, {transform_indices = @transform_2, window_bounds = array<i64: 1, 128>}, {transform_indices = @transform_3, window_bounds = array<i64: 128, 128>}, {pipeline_mode = #tpu.pipeline_mode<synchronous>, transform_indices = @transform_4, window_bounds = array<i64: 1, 128>}, {transform_indices = @transform_5, window_bounds = array<i64: 16, 128>}]} {
    %c0_i32 = arith.constant 0 : i32
    %0 = arith.cmpi eq, %arg1, %c0_i32 : i32
    %1 = arith.extui %0 : i1 to i32
    %c0_i32_0 = arith.constant 0 : i32
    %2 = arith.cmpi ne, %1, %c0_i32_0 : i32
    scf.if %2 {
      %cst_16 = arith.constant 0.000000e+00 : f32
      %21 = vector.broadcast %cst_16 : f32 to vector<16x128xf32>
      %c0_17 = arith.constant 0 : index
      %c0_18 = arith.constant 0 : index
      %22 = vector.load %arg8[%c0_17, %c0_18] : memref<16x128xf32, #tpu.memory_space<vmem>>, vector<16x128xf32>
      tpu.vector_store %arg8[%c0_17, %c0_18], %21 {strides = array<i32>} : memref<16x128xf32, #tpu.memory_space<vmem>>, vector<16x128xf32>,
    } else {
    }
    %c0 = arith.constant 0 : index
    %c0_1 = arith.constant 0 : index
    %3 = vector.load %arg2[%c0, %c0_1] : memref<16x128xbf16, #tpu.memory_space<vmem>>, vector<16x128xbf16>
    %c0_2 = arith.constant 0 : index
    %c0_3 = arith.constant 0 : index
    %4 = vector.load %arg3[%c0_2, %c0_3] : memref<128x128xbf16, #tpu.memory_space<vmem>>, vector<128x128xbf16>
    %cst = arith.constant dense<0.000000e+00> : vector<16x128xf32>
    %5 = tpu.matmul %3, %4, %cst {dimension_numbers = #tpu.dot_dimension_numbers<[1], [0], [0], [1], [0, 0, 1, 1], [], []>} : vector<16x128xbf16>, vector<128x128xbf16>, vector<16x128xf32> -> vector<16x128xf32>
    %c0_4 = arith.constant 0 : index
    %c0_5 = arith.constant 0 : index
    %6 = vector.load %arg4[%c0_4, %c0_5] : memref<1x128xf32, #tpu.memory_space<vmem>>, vector<1x128xf32>
    %7 = vector.broadcast %6 : vector<1x128xf32> to vector<16x128xf32>
    %8 = arith.addf %5, %7 : vector<16x128xf32>
    %cst_6 = arith.constant 0.00999999977 : f32
    %9 = vector.broadcast %cst_6 : f32 to vector<16x128xf32>
    %10 = arith.mulf %9, %8 : vector<16x128xf32>
    %11 = arith.maximumf %8, %10 : vector<16x128xf32>
    %c0_7 = arith.constant 0 : index
    %c0_8 = arith.constant 0 : index
    %12 = vector.load %arg8[%c0_7, %c0_8] : memref<16x128xf32, #tpu.memory_space<vmem>>, vector<16x128xf32>
    %13 = arith.truncf %11 : vector<16x128xf32> to vector<16x128xbf16>
    %c0_9 = arith.constant 0 : index
    %c0_10 = arith.constant 0 : index
    %14 = vector.load %arg5[%c0_9, %c0_10] : memref<128x128xbf16, #tpu.memory_space<vmem>>, vector<128x128xbf16>
    %cst_11 = arith.constant dense<0.000000e+00> : vector<16x128xf32>
    %15 = tpu.matmul %13, %14, %cst_11 {dimension_numbers = #tpu.dot_dimension_numbers<[1], [0], [0], [1], [0, 0, 1, 1], [], []>} : vector<16x128xbf16>, vector<128x128xbf16>, vector<16x128xf32> -> vector<16x128xf32>
    %16 = arith.addf %12, %15 : vector<16x128xf32>
    %c0_12 = arith.constant 0 : index
    %c0_13 = arith.constant 0 : index
    %17 = vector.load %arg8[%c0_12, %c0_13] : memref<16x128xf32, #tpu.memory_space<vmem>>, vector<16x128xf32>
    tpu.vector_store %arg8[%c0_12, %c0_13], %16 {strides = array<i32>} : memref<16x128xf32, #tpu.memory_space<vmem>>, vector<16x128xf32>,
    %c0_i32_14 = arith.constant 0 : i32
    %18 = arith.cmpi eq, %arg1, %c0_i32_14 : i32
    %19 = arith.extui %18 : i1 to i32
    %c0_i32_15 = arith.constant 0 : i32
    %20 = arith.cmpi ne, %19, %c0_i32_15 : i32
    scf.if %20 {
      %c0_16 = arith.constant 0 : index
      %c0_17 = arith.constant 0 : index
      %21 = vector.load %arg8[%c0_16, %c0_17] : memref<16x128xf32, #tpu.memory_space<vmem>>, vector<16x128xf32>
      %c0_18 = arith.constant 0 : index
      %c0_19 = arith.constant 0 : index
      %22 = vector.load %arg6[%c0_18, %c0_19] : memref<1x128xf32, #tpu.memory_space<vmem>>, vector<1x128xf32>
      %23 = vector.broadcast %22 : vector<1x128xf32> to vector<16x128xf32>
      %24 = arith.addf %21, %23 : vector<16x128xf32>
      %c0_20 = arith.constant 0 : index
      %c0_21 = arith.constant 0 : index
      %25 = vector.load %arg7[%c0_20, %c0_21] : memref<16x128xf32, #tpu.memory_space<vmem>>, vector<16x128xf32>
      tpu.vector_store %arg7[%c0_20, %c0_21], %24 {strides = array<i32>} : memref<16x128xf32, #tpu.memory_space<vmem>>, vector<16x128xf32>,
    } else {
    }
    return
  }
  func.func @transform_0(%arg0: i32, %arg1: i32) -> (i32, i32) {
    %c0_i32 = arith.constant 0 : i32
    %c0_i32_0 = arith.constant 0 : i32
    return %arg0, %c0_i32 : i32, i32
  }
  func.func @transform_1(%arg0: i32, %arg1: i32) -> (i32, i32) {
    %c0_i32 = arith.constant 0 : i32
    %c0_i32_0 = arith.constant 0 : i32
    return %c0_i32, %arg1 : i32, i32
  }
  func.func @transform_2(%arg0: i32, %arg1: i32) -> (i32, i32) {
    %c0_i32 = arith.constant 0 : i32
    %c0_i32_0 = arith.constant 0 : i32
    return %c0_i32, %arg1 : i32, i32
  }
  func.func @transform_3(%arg0: i32, %arg1: i32) -> (i32, i32) {
    %c0_i32 = arith.constant 0 : i32
    %c0_i32_0 = arith.constant 0 : i32
    return %arg1, %c0_i32 : i32, i32
  }
  func.func @transform_4(%arg0: i32, %arg1: i32) -> (i32, i32) {
    %c0_i32 = arith.constant 0 : i32
    %c0_i32_0 = arith.constant 0 : i32
    %c0_i32_1 = arith.constant 0 : i32
    return %c0_i32, %c0_i32_0 : i32, i32
  }
  func.func @transform_5(%arg0: i32, %arg1: i32) -> (i32, i32) {
    %c0_i32 = arith.constant 0 : i32
    %c0_i32_0 = arith.constant 0 : i32
    return %arg0, %c0_i32 : i32, i32
  }
}

</mosaic_0001>

<llo_original>
// kernel: apply.1
$region0: #{apply.1}
  #allocation0 [shape = 'u32[]', space=smem, size = 0x4, offset = 0x4, fixed_abs, tag = 'smem constant byte address 0x4 - core index']
  #allocation1 [shape = 'u32[72,128]{1,0:T(1,128)}', space=vmem, size = 0x9000, scoped, tag = 'internal scratch']
  #allocation2 [shape = 'f32[16,128]{1,0:T(8,128)}', space=vmem, size = 0x2000, scoped, tag = 'scratch operand']
  %s0 = inlined_call_operand.vmem [shape: bf16[16,128], index: 0, kind: input, shape index: {}]
  %s1 = inlined_call_operand.hbm [shape: bf16[128,128], index: 1, kind: input, shape index: {}]
  %s2 = inlined_call_operand.vmem [shape: f32[1,128], index: 2, kind: input, shape index: {}]
  %s3 = inlined_call_operand.hbm [shape: bf16[128,128], index: 3, kind: input, shape index: {}]
  %s4 = inlined_call_operand.vmem [shape: f32[1,128], index: 4, kind: input, shape index: {}]
  %s5 = inlined_call_operand.vmem [shape: f32[16,128], index: 5, kind: output, shape index: {}]
  %s6 = sld [smem:[#allocation0]]
  $region46: #{apply.1} parent=0
    _
  %s8 = ssub.s32 1, %s6
  %s9 = scalar_select 0, %s8, %s6
  $region1: #{apply.1} parent=0
    #allocation3 [shape = 'u8[32768]{0}', space=vmem, size = 0x8000, scoped, tag = 'input window, operand 1, single buffered']
    #allocation4 [shape = 's32[1]{0}', space=sflag, size = 0x4, scoped, tag = 'scoped memory for apply.1']
    #allocation5 [shape = 'u8[32768]{0}', space=vmem, size = 0x8000, scoped, tag = 'input window, operand 3, single buffered']
    #allocation6 [shape = 's32[1]{0}', space=sflag, size = 0x4, scoped, tag = 'scoped memory for apply.1']
    %10 = vsyncpa [#allocation4], 0
    %11 = vsyncpa [#allocation6], 0
    // Predicated region
    $region2: #{apply.1} parent=1 // pred_check
      _
    $region3: #{apply.1} parent=1 // pred_check_branch
      %13 = sbr.rel (0) target = $region5
    $region4: #{apply.1} parent=1 // pred_region
      _
    $region5: #{apply.1} parent=1 // pred_fallthru
      _
    // Predicated region
    $region6: #{apply.1} parent=1 // pred_check
      _
    $region7: #{apply.1} parent=1 // pred_check_branch
      %15 = sbr.rel (0) target = $region9
    $region8: #{apply.1} parent=1 // pred_region
      %17 = vsyncadd [#allocation4], 0
      %s18 = sshll.u32 %s1, 4
      %s19 = int_to_ptr.hbm [resolvable:$true] %s18
      %s20 = sshll.u32 [#allocation3], 4
      %s21 = int_to_ptr.vmem [resolvable:$true] %s20
      %26 = dma.hbm_to_vmem [thread:$0]  %s19, 1024, %s21, [#allocation4], 64, 64, 4
    $region9: #{apply.1} parent=1 // pred_fallthru
      _
    // Predicated region
    $region10: #{apply.1} parent=1 // pred_check
      _
    $region11: #{apply.1} parent=1 // pred_check_branch
      %28 = sbr.rel (0) target = $region13
    $region12: #{apply.1} parent=1 // pred_region
      _
    $region13: #{apply.1} parent=1 // pred_fallthru
      _
    // Predicated region
    $region14: #{apply.1} parent=1 // pred_check
      _
    $region15: #{apply.1} parent=1 // pred_check_branch
      %30 = sbr.rel (0) target = $region17
    $region16: #{apply.1} parent=1 // pred_region
      %32 = vsyncadd [#allocation6], 0
      %s33 = sshll.u32 %s3, 4
      %s34 = int_to_ptr.hbm [resolvable:$true] %s33
      %s35 = sshll.u32 [#allocation5], 4
      %s36 = int_to_ptr.vmem [resolvable:$true] %s35
      %41 = dma.hbm_to_vmem [thread:$0]  %s34, 1024, %s36, [#allocation6], 64, 64, 4
    $region17: #{apply.1} parent=1 // pred_fallthru
      _
    // Predicated region
    $region18: #{apply.1} parent=1 // pred_check
      _
    $region19: #{apply.1} parent=1 // pred_check_branch
      %43 = sbr.rel (0) target = $region21
    $region20: #{apply.1} parent=1 // pred_region
      _
    $region21: #{apply.1} parent=1 // pred_fallthru
      _
    // Predicated region
    $region22: #{apply.1} parent=1 // pred_check
      _
    $region23: #{apply.1} parent=1 // pred_check_branch
      %45 = sbr.rel (0) target = $region25
    $region24: #{apply.1} parent=1 // pred_region
      %47 = dma.done [#allocation4], 1024
    $region25: #{apply.1} parent=1 // pred_fallthru
      _
    // Predicated region
    $region26: #{apply.1} parent=1 // pred_check
      _
    $region27: #{apply.1} parent=1 // pred_check_branch
      %49 = sbr.rel (0) target = $region29
    $region28: #{apply.1} parent=1 // pred_region
      %51 = dma.done [#allocation6], 1024
    $region29: #{apply.1} parent=1 // pred_fallthru
      _
    %p52 = scmp.eq.s32.totalorder 0, 0
    // Predicated region
    $region30: #{apply.1} parent=1 // pred_check
      %p53 = pneg %p52
    $region31: #{apply.1} parent=1 // pred_check_branch
      %55 = sbr.rel (%p53) target = $region33
    $region32: #{apply.1} parent=1 // pred_region
      %56 = vst [vmem:[#allocation2] sm:$0xff] 0.0
      %57 = vst [vmem:[#allocation2 + $0x8] sm:$0xff] 0.0
    $region33: #{apply.1} parent=1 // pred_fallthru
      _
    %v58 = vld [vmem:[%s0] sm:$0xf]
    %v59 = vld [vmem:[%s0 + $0x4] sm:$0xf]
    %v60 = vld [vmem:[#allocation3] sm:$0xf]
    %v61 = vld [vmem:[#allocation3 + $0x4] sm:$0xf]
    %v62 = vld [vmem:[#allocation3 + $0x8] sm:$0xf]
    %v63 = vld [vmem:[#allocation3 + $0xc] sm:$0xf]
    %v64 = vld [vmem:[#allocation3 + $0x10] sm:$0xf]
    %v65 = vld [vmem:[#allocation3 + $0x14] sm:$0xf]
    %v66 = vld [vmem:[#allocation3 + $0x18] sm:$0xf]
    %v67 = vld [vmem:[#allocation3 + $0x1c] sm:$0xf]
    %v68 = vld [vmem:[#allocation3 + $0x20] sm:$0xf]
    %v69 = vld [vmem:[#allocation3 + $0x24] sm:$0xf]
    %v70 = vld [vmem:[#allocation3 + $0x28] sm:$0xf]
    %v71 = vld [vmem:[#allocation3 + $0x2c] sm:$0xf]
    %v72 = vld [vmem:[#allocation3 + $0x30] sm:$0xf]
    %v73 = vld [vmem:[#allocation3 + $0x34] sm:$0xf]
    %v74 = vld [vmem:[#allocation3 + $0x38] sm:$0xf]
    %v75 = vld [vmem:[#allocation3 + $0x3c] sm:$0xf]
    %v76 = vld [vmem:[%s2] sm:$0x1]
    %v78 = vperm.slane %v76, 0
    %v82 = vunpack.c.l.b16 %v58
    %v83 = vunpack.c.l.b16 %v59
    %v84 = vpack.c.b16 %v83, %v82
    %v102 = vunpack.c.l.b16 %v60
    %v103 = vunpack.c.l.b16 %v61
    %v104 = vunpack.c.l.b16 %v62
    %v105 = vunpack.c.l.b16 %v63
    %v106 = vunpack.c.l.b16 %v64
    %v107 = vunpack.c.l.b16 %v65
    %v108 = vunpack.c.l.b16 %v66
    %v109 = vunpack.c.l.b16 %v67
    %v110 = vunpack.c.l.b16 %v68
    %v111 = vunpack.c.l.b16 %v69
    %v112 = vunpack.c.l.b16 %v70
    %v113 = vunpack.c.l.b16 %v71
    %v114 = vunpack.c.l.b16 %v72
    %v115 = vunpack.c.l.b16 %v73
    %v116 = vunpack.c.l.b16 %v74
    %v117 = vunpack.c.l.b16 %v75
    %v118 = vpack.c.b16 %v103, %v102
    %v119 = vpack.c.b16 %v105, %v104
    %v120 = vpack.c.b16 %v107, %v106
    %v121 = vpack.c.b16 %v109, %v108
    %v122 = vpack.c.b16 %v111, %v110
    %v123 = vpack.c.b16 %v113, %v112
    %v124 = vpack.c.b16 %v115, %v114
    %v125 = vpack.c.b16 %v117, %v116
    %134 = vmatpush.bf16.msra.mxu0 %v125
    %135 = vmatpush.bf16.msra.mxu0 %v124
    %136 = vmatpush.bf16.msra.mxu0 %v123
    %137 = vmatpush.bf16.msra.mxu0 %v122
    %138 = vmatpush.bf16.msra.mxu0 %v121
    %139 = vmatpush.bf16.msra.mxu0 %v120
    %140 = vmatpush.bf16.msra.mxu0 %v119
    %141 = vmatpush.bf16.msra.mxu0 %v118
    %142 = vmatmul.bf16.gmra.mxu0 %v84
    %v143 = vpop.f32.mrf.mxu0
    %v144 = vadd.f32 %v78, %v143
    %v145 = vpop.f32.mrf.mxu0
    %v146 = vadd.f32 %v78, %v145
    %147 = vdwg.mxu0
    %v148 = vmul.f32 %v144, 0.01
    %v149 = vmul.f32 %v146, 0.01
    %v150 = vmax.f32 %v144, %v148
    %v151 = vmax.f32 %v146, %v149
    %v152 = vld [vmem:[#allocation2] sm:$0xff]
    %v153 = vld [vmem:[#allocation2 + $0x8] sm:$0xff]
    %v154 = vpack.c.bf16 %v151, %v150
    %v155 = vld [vmem:[#allocation5] sm:$0xf]
    %v156 = vld [vmem:[#allocation5 + $0x4] sm:$0xf]
    %v157 = vld [vmem:[#allocation5 + $0x8] sm:$0xf]
    %v158 = vld [vmem:[#allocation5 + $0xc] sm:$0xf]
    %v159 = vld [vmem:[#allocation5 + $0x10] sm:$0xf]
    %v160 = vld [vmem:[#allocation5 + $0x14] sm:$0xf]
    %v161 = vld [vmem:[#allocation5 + $0x18] sm:$0xf]
    %v162 = vld [vmem:[#allocation5 + $0x1c] sm:$0xf]
    %v163 = vld [vmem:[#allocation5 + $0x20] sm:$0xf]
    %v164 = vld [vmem:[#allocation5 + $0x24] sm:$0xf]
    %v165 = vld [vmem:[#allocation5 + $0x28] sm:$0xf]
    %v166 = vld [vmem:[#allocation5 + $0x2c] sm:$0xf]
    %v167 = vld [vmem:[#allocation5 + $0x30] sm:$0xf]
    %v168 = vld [vmem:[#allocation5 + $0x34] sm:$0xf]
    %v169 = vld [vmem:[#allocation5 + $0x38] sm:$0xf]
    %v170 = vld [vmem:[#allocation5 + $0x3c] sm:$0xf]
    %v187 = vunpack.c.l.b16 %v155
    %v188 = vunpack.c.l.b16 %v156
    %v189 = vunpack.c.l.b16 %v157
    %v190 = vunpack.c.l.b16 %v158
    %v191 = vunpack.c.l.b16 %v159
    %v192 = vunpack.c.l.b16 %v160
    %v193 = vunpack.c.l.b16 %v161
    %v194 = vunpack.c.l.b16 %v162
    %v195 = vunpack.c.l.b16 %v163
    %v196 = vunpack.c.l.b16 %v164
    %v197 = vunpack.c.l.b16 %v165
    %v198 = vunpack.c.l.b16 %v166
    %v199 = vunpack.c.l.b16 %v167
    %v200 = vunpack.c.l.b16 %v168
    %v201 = vunpack.c.l.b16 %v169
    %v202 = vunpack.c.l.b16 %v170
    %v203 = vpack.c.b16 %v188, %v187
    %v204 = vpack.c.b16 %v190, %v189
    %v205 = vpack.c.b16 %v192, %v191
    %v206 = vpack.c.b16 %v194, %v193
    %v207 = vpack.c.b16 %v196, %v195
    %v208 = vpack.c.b16 %v198, %v197
    %v209 = vpack.c.b16 %v200, %v199
    %v210 = vpack.c.b16 %v202, %v201
    %219 = vmatpush.bf16.msra.mxu0 %v210
    %220 = vmatpush.bf16.msra.mxu0 %v209
    %221 = vmatpush.bf16.msra.mxu0 %v208
    %222 = vmatpush.bf16.msra.mxu0 %v207
    %223 = vmatpush.bf16.msra.mxu0 %v206
    %224 = vmatpush.bf16.msra.mxu0 %v205
    %225 = vmatpush.bf16.msra.mxu0 %v204
    %226 = vmatpush.bf16.msra.mxu0 %v203
    %227 = vmatmul.bf16.gmra.mxu0 %v154
    %v228 = vpop.f32.mrf.mxu0
    %v229 = vadd.f32 0.0, %v228
    %v230 = vpop.f32.mrf.mxu0
    %v231 = vadd.f32 0.0, %v230
    %232 = vdwg.mxu0
    %v233 = vadd.f32 %v152, %v229
    %v234 = vadd.f32 %v153, %v231
    %235 = vst [vmem:[#allocation2] sm:$0xff] %v233
    %236 = vst [vmem:[#allocation2 + $0x8] sm:$0xff] %v234
    // Predicated region
    $region34: #{apply.1} parent=1 // pred_check
      %p237 = pneg %p52
    $region35: #{apply.1} parent=1 // pred_check_branch
      %239 = sbr.rel (%p237) target = $region37
    $region36: #{apply.1} parent=1 // pred_region
      %v240 = vld [vmem:[#allocation2] sm:$0xff]
      %v241 = vld [vmem:[#allocation2 + $0x8] sm:$0xff]
      %v242 = vld [vmem:[%s4] sm:$0x1]
      %v244 = vperm.slane %v242, 0
      %v246 = vadd.f32 %v240, %v244
      %v247 = vadd.f32 %v241, %v244
      %248 = vst [vmem:[%s5] sm:$0xff] %v246
      %249 = vst [vmem:[%s5 + $0x8] sm:$0xff] %v247
    $region37: #{apply.1} parent=1 // pred_fallthru
      _
    // Predicated region
    $region38: #{apply.1} parent=1 // pred_check
      _
    $region39: #{apply.1} parent=1 // pred_check_branch
      %251 = sbr.rel (0) target = $region41
    $region40: #{apply.1} parent=1 // pred_region
      _
    $region41: #{apply.1} parent=1 // pred_fallthru
      _
    // Predicated region
    $region42: #{apply.1} parent=1 // pred_check
      _
    $region43: #{apply.1} parent=1 // pred_check_branch
      %253 = sbr.rel (0) target = $region45
    $region44: #{apply.1} parent=1 // pred_region
      _
    $region45: #{apply.1} parent=1 // pred_fallthru
      _
    %254 = vsyncpa [#allocation4], 1
    %255 = vsyncpa [#allocation6], 1

</llo_original>
